<compile_context>
chip_gen: v7x
topology: tpu7x:2x2x1
jax: 0.10.0
libtpu: 0.0.40
codegen_flags: <defaults>
</compile_context>

<pallas_src>
import functools

import jax
import jax.numpy as jnp
from jax.experimental import pallas as pl
from jax.experimental.pallas import tpu as pltpu


def _neighbor_sum(sq):
    """sq[..., c-1] + sq[..., c] + sq[..., c+1] (cyclic) along the lane axis."""
    tc = sq.shape[-1]
    if tc % 128 == 0:
        # 128-aligned lane dim: XLU rotations (free slot under the DMA).
        # Shifts of 1 and tc-1 pick up both lane neighbours regardless of the
        # rotation direction convention.
        return (sq + pltpu.roll(sq, shift=1, axis=1)
                + pltpu.roll(sq, shift=tc - 1, axis=1))
    # Small / unaligned lane dim (whole row fits one unaligned lane span):
    # jnp.roll lowers to a lane-dim concatenate of static slices.
    return sq + jnp.roll(sq, 1, axis=1) + jnp.roll(sq, -1, axis=1)


def _mpjpe_kernel(pred_ref, label_ref, partial_ref, *,
                  rows, cols, tile_r, tile_c, mask_rows, mask_cols):
    # Grid: (row tiles [parallel], column tiles [arbitrary / reduction]).
    j = pl.program_id(1)

    @pl.when(j == 0)
    def _init():
        partial_ref[...] = jnp.zeros_like(partial_ref)

    d = pred_ref[...].astype(jnp.float32) - label_ref[...].astype(jnp.float32)
    sq = d * d

    # Zero out-of-range rows / lanes of ragged boundary tiles BEFORE the
    # neighbour sum, so unspecified boundary-tile memory contributes exactly 0
    # (and NaN/Inf garbage never reaches the adds).
    if mask_rows:
        row_ids = pl.program_id(0) * tile_r + jax.lax.broadcasted_iota(
            jnp.int32, sq.shape, 0)
        sq = jnp.where(row_ids < rows, sq, 0.0)
    if mask_cols:
        col_ids = j * tile_c + jax.lax.broadcasted_iota(
            jnp.int32, sq.shape, 1)
        sq = jnp.where(col_ids < cols, sq, 0.0)

    # tile_c % 3 == 0, so a joint's (x, y, z) never straddles a tile and lane
    # c always holds coordinate c % 3.  The neighbour sum puts x^2+y^2+z^2 on
    # each joint's y-lane; keep only those lanes (everything else becomes
    # sqrt(0) = 0).  The y-lane mask is built in-kernel from a lane iota; the
    # mod-3 is done with f32 multiply + truncating casts (exact for lane
    # counts < ~1e6) to avoid relying on vector integer remainder.
    lane_f = jax.lax.broadcasted_iota(
        jnp.int32, sq.shape, 1).astype(jnp.float32)
    third = (lane_f * (1.0 / 3.0)).astype(jnp.int32).astype(jnp.float32)
    is_y = (lane_f - 3.0 * third) == 1.0
    len_sq = jnp.where(is_y, _neighbor_sum(sq), 0.0)

    # Per-step reduce-to-scalar (hides under the streaming DMA), accumulated
    # straight into the resident (1, 1, 128) output block: no full-tile VMEM
    # accumulator and no separate finalize pass.
    partial_ref[...] = partial_ref[...] + jnp.sum(jnp.sqrt(len_sq))


def mpjpe_criterion(pred, label, weight=1.0):
    """JAX/Pallas equivalent of MPJPECriterion(weight)(pred, label)."""
    assert pred.shape == label.shape
    batch = pred.shape[0]
    x = pred.reshape(batch, -1)   # free reshape: natural interleaved layout
    y = label.reshape(batch, -1)
    dim = x.shape[1]
    assert dim % 3 == 0, "interleaved (x,y,z) input must have 3*n_joints coords"
    total = batch * dim
    n_joints_total = total // 3

    # ---- Layout selection (all reshapes are free / row-major) -------------
    # Lane-dense path: reinterpret the flat coordinate stream as (rows, W)
    # with W a multiple of 384 = lcm(3, 128): triplets stay row-local at
    # lane % 3 positions, lanes are 100% occupied and pltpu.roll stays
    # 128-aligned.  Only taken when it is an exact (free) reshape; otherwise
    # keep the natural (B, D) layout (never jnp.pad / transpose the inputs).
    width = 0
    for cand in (1536, 1152, 768, 384):
        if total % cand == 0:
            width = cand
            break
    if width:
        x2 = x.reshape(-1, width)
        y2 = y.reshape(-1, width)
    else:
        x2, y2 = x, y
    rows, cols = x2.shape

    # ---- Lane (column) tile -------------------------------------------------
    if cols <= 1536:
        tile_c = cols                              # whole row per block
    else:
        tile_c = min(1536, (cols // 384) * 384)    # keep triplets tile-local
    assert tile_c % 3 == 0

    # ---- Sublane (row) tile: ~4 MiB of input per block per grid step --------
    # Sized on the 128-lane-padded footprint so narrow fall-back layouts don't
    # blow the VMEM budget: 2 inputs x 2 pipeline buffers x 4 MiB ≈ 16 MiB,
    # comfortably inside the 32 MiB scoped request on all generations
    # (incl. v7x's 64 MiB physical VMEM).
    itemsize = jnp.dtype(x2.dtype).itemsize
    sub = 16 if itemsize < 4 else 8                # sublane packing (bf16/f32)
    padded_c = ((tile_c + 127) // 128) * 128
    max_rows = max(sub, ((4 << 20) // (padded_c * itemsize)) // sub * sub)
    tile_r = rows if rows <= max_rows else max_rows
    # v7x megacore: give the "parallel" row axis >= 2 blocks when possible so
    # both TensorCores get work (no-op on single-TC v5e/v6e).
    if tile_r == rows and rows > sub:
        half = (((rows + 1) // 2) + sub - 1) // sub * sub
        if half < rows:
            tile_r = half

    n_row_tiles = pl.cdiv(rows, tile_r)
    n_col_tiles = pl.cdiv(cols, tile_c)
    mask_rows = (rows % tile_r) != 0
    mask_cols = (cols % tile_c) != 0

    kernel = functools.partial(
        _mpjpe_kernel, rows=rows, cols=cols, tile_r=tile_r, tile_c=tile_c,
        mask_rows=mask_rows, mask_cols=mask_cols)

    cost = pl.CostEstimate(
        flops=10 * total,
        transcendentals=n_row_tiles * n_col_tiles * tile_r * tile_c,
        bytes_accessed=2 * total * itemsize + n_row_tiles * 128 * 4,
    )

    partials = pl.pallas_call(
        kernel,
        out_shape=jax.ShapeDtypeStruct((n_row_tiles, 1, 128), jnp.float32),
        grid_spec=pltpu.PrefetchScalarGridSpec(
            num_scalar_prefetch=0,
            grid=(n_row_tiles, n_col_tiles),
            in_specs=[
                pl.BlockSpec((tile_r, tile_c), lambda i, j: (i, j)),
                pl.BlockSpec((tile_r, tile_c), lambda i, j: (i, j)),
            ],
            out_specs=pl.BlockSpec((1, 1, 128), lambda i, j: (i, 0, 0)),
        ),
        compiler_params=pltpu.CompilerParams(
            dimension_semantics=("parallel", "arbitrary"),
            vmem_limit_bytes=32 * 1024 * 1024,
        ),
        cost_estimate=cost,
    )(x2, y2)

    # Cheap glue: sum the per-row-tile partials, take the mean, apply weight.
    total_len = jnp.sum(partials[:, 0, 0])
    return jnp.float32(weight) * total_len / jnp.float32(n_joints_total)


def mpjpe_reference(pred, label, weight=1.0):
    """Pure-JAX reference mirroring the PyTorch module."""
    batch = pred.shape[0]
    diff = (pred - label).astype(jnp.float32).reshape(batch, -1, 3)
    lens = jnp.sqrt(jnp.sum(diff * diff, axis=2))
    return jnp.float32(weight) * jnp.mean(lens)


if __name__ == "__main__":
    key = jax.random.PRNGKey(0)
    weight = 1.0  # module's __init__ default

    # (batch, n_joints): exercises (1) the natural-layout / unaligned-roll
    # fall-back, (2) the lane-dense flattened layout + aligned pltpu.roll,
    # (3) a multi-row-tile grid with ragged-row masking (parallel axis >= 2).
    test_shapes = [(2, 8), (8, 144), (48, 96)]

    for idx, (batch, n_joints) in enumerate(test_shapes):
        k1, k2 = jax.random.split(jax.random.fold_in(key, idx))
        pred = jax.random.normal(k1, (batch, n_joints * 3), dtype=jnp.float32)
        label = jax.random.normal(k2, (batch, n_joints * 3), dtype=jnp.float32)

        fn = jax.jit(functools.partial(mpjpe_criterion, weight=weight))
        out = jax.block_until_ready(fn(pred, label))
        ref = mpjpe_reference(pred, label, weight)
        assert jnp.allclose(out, ref, rtol=1e-4, atol=1e-6), (
            (batch, n_joints), out, ref)

    print("KERNEL_OK")
</pallas_src>

<mosaic_0001>
module attributes {stable_mosaic.version = 11 : i64} {
  func.func @_mpjpe_kernel(%arg0: i32, %arg1: i32, %arg2: memref<2x24xf32, #tpu.memory_space<vmem>>, %arg3: memref<2x24xf32, #tpu.memory_space<vmem>>, %arg4: memref<1x1x128xf32, #tpu.memory_space<vmem>>) attributes {dimension_semantics = [#tpu.dimension_semantics<parallel>, #tpu.dimension_semantics<arbitrary>], iteration_bounds = array<i64: 1, 1>, scalar_prefetch = 0 : i64, scratch_operands = 0 : i64, tpu.core_type = #tpu.core_type<tc>, window_params = [{transform_indices = @transform_0, window_bounds = array<i64: 2, 24>}, {transform_indices = @transform_1, window_bounds = array<i64: 2, 24>}, {transform_indices = @transform_2, window_bounds = array<i64: 1, 1, 128>}]} {
    %c0_i32 = arith.constant 0 : i32
    %0 = arith.cmpi eq, %arg1, %c0_i32 : i32
    %1 = arith.extui %0 : i1 to i32
    %c0_i32_0 = arith.constant 0 : i32
    %2 = arith.cmpi ne, %1, %c0_i32_0 : i32
    scf.if %2 {
      %cst_14 = arith.constant 0.000000e+00 : f32
      %37 = vector.broadcast %cst_14 : f32 to vector<1x1x128xf32>
      %c0_15 = arith.constant 0 : index
      %c0_16 = arith.constant 0 : index
      %c0_17 = arith.constant 0 : index
      %38 = vector.load %arg4[%c0_15, %c0_16, %c0_17] : memref<1x1x128xf32, #tpu.memory_space<vmem>>, vector<1x1x128xf32>
      tpu.vector_store %arg4[%c0_15, %c0_16, %c0_17], %37 {strides = array<i32>} : memref<1x1x128xf32, #tpu.memory_space<vmem>>, vector<1x1x128xf32>,
    } else {
    }
    %c0 = arith.constant 0 : index
    %c0_1 = arith.constant 0 : index
    %3 = vector.load %arg2[%c0, %c0_1] : memref<2x24xf32, #tpu.memory_space<vmem>>, vector<2x24xf32>
    %c0_2 = arith.constant 0 : index
    %c0_3 = arith.constant 0 : index
    %4 = vector.load %arg3[%c0_2, %c0_3] : memref<2x24xf32, #tpu.memory_space<vmem>>, vector<2x24xf32>
    %5 = arith.subf %3, %4 : vector<2x24xf32>
    %6 = arith.mulf %5, %5 : vector<2x24xf32>
    %7 = tpu.iota {dimensions = array<i32: 1>} : vector<2x24xi32>
    %8 = arith.sitofp %7 : vector<2x24xi32> to vector<2x24xf32>
    %cst = arith.constant 0.333333343 : f32
    %9 = vector.broadcast %cst : f32 to vector<2x24xf32>
    %10 = arith.mulf %8, %9 : vector<2x24xf32>
    %11 = arith.fptosi %10 : vector<2x24xf32> to vector<2x24xi32>
    %12 = arith.sitofp %11 : vector<2x24xi32> to vector<2x24xf32>
    %cst_4 = arith.constant 3.000000e+00 : f32
    %13 = vector.broadcast %cst_4 : f32 to vector<2x24xf32>
    %14 = arith.mulf %13, %12 : vector<2x24xf32>
    %15 = arith.subf %8, %14 : vector<2x24xf32>
    %cst_5 = arith.constant 1.000000e+00 : f32
    %16 = vector.broadcast %cst_5 : f32 to vector<2x24xf32>
    %17 = arith.cmpf oeq, %15, %16 : vector<2x24xf32>
    %18 = vector.extract_strided_slice %6 {offsets = [0, 23], sizes = [2, 1], strides = [1, 1]} : vector<2x24xf32> to vector<2x1xf32>
    %19 = vector.extract_strided_slice %6 {offsets = [0, 0], sizes = [2, 23], strides = [1, 1]} : vector<2x24xf32> to vector<2x23xf32>
    %20 = tpu.concatenate %18, %19 in 1 : vector<2x1xf32>, vector<2x23xf32> -> vector<2x24xf32>
    %21 = arith.addf %6, %20 : vector<2x24xf32>
    %22 = vector.extract_strided_slice %6 {offsets = [0, 1], sizes = [2, 23], strides = [1, 1]} : vector<2x24xf32> to vector<2x23xf32>
    %23 = vector.extract_strided_slice %6 {offsets = [0, 0], sizes = [2, 1], strides = [1, 1]} : vector<2x24xf32> to vector<2x1xf32>
    %24 = tpu.concatenate %22, %23 in 1 : vector<2x23xf32>, vector<2x1xf32> -> vector<2x24xf32>
    %25 = arith.addf %21, %24 : vector<2x24xf32>
    %cst_6 = arith.constant 0.000000e+00 : f32
    %26 = vector.broadcast %cst_6 : f32 to vector<2x24xf32>
    %27 = arith.select %17, %25, %26 : vector<2x24xi1>, vector<2x24xf32>
    %c0_7 = arith.constant 0 : index
    %c0_8 = arith.constant 0 : index
    %c0_9 = arith.constant 0 : index
    %28 = vector.load %arg4[%c0_7, %c0_8, %c0_9] : memref<1x1x128xf32, #tpu.memory_space<vmem>>, vector<1x1x128xf32>
    %29 = math.sqrt %27 : vector<2x24xf32>
    %30 = vector.shape_cast %29 : vector<2x24xf32> to vector<1x2x24xf32>
    %cst_10 = arith.constant dense<0.000000e+00> : vector<1xf32>
    %31 = vector.multi_reduction <add>, %30, %cst_10 [1, 2] : vector<1x2x24xf32> to vector<1xf32>
    %32 = vector.shape_cast %31 : vector<1xf32> to vector<1x1x1xf32>
    %33 = vector.extract %32[0, 0, 0] : f32 from vector<1x1x1xf32>
    %34 = vector.broadcast %33 : f32 to vector<1x1x128xf32>
    %35 = arith.addf %28, %34 : vector<1x1x128xf32>
    %c0_11 = arith.constant 0 : index
    %c0_12 = arith.constant 0 : index
    %c0_13 = arith.constant 0 : index
    %36 = vector.load %arg4[%c0_11, %c0_12, %c0_13] : memref<1x1x128xf32, #tpu.memory_space<vmem>>, vector<1x1x128xf32>
    tpu.vector_store %arg4[%c0_11, %c0_12, %c0_13], %35 {strides = array<i32>} : memref<1x1x128xf32, #tpu.memory_space<vmem>>, vector<1x1x128xf32>,
    return
  }
  func.func @transform_0(%arg0: i32, %arg1: i32) -> (i32, i32) {
    %c0_i32 = arith.constant 0 : i32
    return %arg0, %arg1 : i32, i32
  }
  func.func @transform_1(%arg0: i32, %arg1: i32) -> (i32, i32) {
    %c0_i32 = arith.constant 0 : i32
    return %arg0, %arg1 : i32, i32
  }
  func.func @transform_2(%arg0: i32, %arg1: i32) -> (i32, i32, i32) {
    %c0_i32 = arith.constant 0 : i32
    %c0_i32_0 = arith.constant 0 : i32
    %c0_i32_1 = arith.constant 0 : i32
    return %arg0, %c0_i32, %c0_i32_0 : i32, i32, i32
  }
}

</mosaic_0001>

<llo_original>
// kernel: mpjpe_criterion.1
$region0: #{mpjpe_criterion.1}
  #allocation0 [shape = 'u32[]', space=smem, size = 0x4, offset = 0x4, fixed_abs, tag = 'smem constant byte address 0x4 - core index']
  #allocation1 [shape = 'u32[144,128]{1,0:T(1,128)}', space=vmem, size = 0x12000, scoped, tag = 'internal scratch']
  %s0 = inlined_call_operand.hbm [shape: f32[2,24], index: 0, kind: input, shape index: {}]
  %s1 = inlined_call_operand.vmem [shape: f32[2,24], index: 1, kind: input, shape index: {}]
  %s2 = inlined_call_operand.vmem [shape: f32[1,1,128], index: 2, kind: output, shape index: {}]
  %s3 = sld [smem:[#allocation0]]
  $region26: #{mpjpe_criterion.1} parent=0
    _
  %s5 = ssub.s32 1, %s3
  %s6 = scalar_select 0, %s5, %s3
  $region1: #{mpjpe_criterion.1} parent=0
    #allocation2 [shape = 'u8[1024]{0}', space=vmem, size = 0x400, scoped, tag = 'input window, operand 0, single buffered']
    #allocation3 [shape = 's32[1]{0}', space=sflag, size = 0x4, scoped, tag = 'scoped memory for mpjpe_criterion.1']
    %7 = vsyncpa [#allocation3], 0
    // Predicated region
    $region2: #{mpjpe_criterion.1} parent=1 // pred_check
      _
    $region3: #{mpjpe_criterion.1} parent=1 // pred_check_branch
      %9 = sbr.rel (0) target = $region5
    $region4: #{mpjpe_criterion.1} parent=1 // pred_region
      %s11 = ssub.s32 32, 32
      %12 = vsyncadd [#allocation3], %s11
      %s14 = sshll.u32 [#allocation2], 4
      %s15 = int_to_ptr.vmem [resolvable:$true] %s14
      %17 = dma.hbm_to_vmem [thread:$0]  %s0, 32, %s15, [#allocation3]
    $region5: #{mpjpe_criterion.1} parent=1 // pred_fallthru
      _
    // Predicated region
    $region6: #{mpjpe_criterion.1} parent=1 // pred_check
      _
    $region7: #{mpjpe_criterion.1} parent=1 // pred_check_branch
      %19 = sbr.rel (0) target = $region9
    $region8: #{mpjpe_criterion.1} parent=1 // pred_region
      _
    $region9: #{mpjpe_criterion.1} parent=1 // pred_fallthru
      _
    // Predicated region
    $region10: #{mpjpe_criterion.1} parent=1 // pred_check
      _
    $region11: #{mpjpe_criterion.1} parent=1 // pred_check_branch
      %21 = sbr.rel (0) target = $region13
    $region12: #{mpjpe_criterion.1} parent=1 // pred_region
      %22 = dma.done [#allocation3], 32
    $region13: #{mpjpe_criterion.1} parent=1 // pred_fallthru
      _
    %p23 = scmp.eq.s32.totalorder 0, 0
    // Predicated region
    $region14: #{mpjpe_criterion.1} parent=1 // pred_check
      %p24 = pneg %p23
    $region15: #{mpjpe_criterion.1} parent=1 // pred_check_branch
      %26 = sbr.rel (%p24) target = $region17
    $region16: #{mpjpe_criterion.1} parent=1 // pred_region
      %27 = vst [vmem:[%s2] sm:$0x1] 0.0
    $region17: #{mpjpe_criterion.1} parent=1 // pred_fallthru
      _
    %v28 = vld [vmem:[#allocation2] sm:$0x3]
    %v29 = vld [vmem:[%s1] sm:$0x3]
    %v30 = vsub.f32 %v28, %v29
    %v31 = vmul.f32 %v30, %v30
    %v32 = vlaneseq
    %v33 = vand.u32 %v32, 127
    %v34 = vcvt.s32.f32 %v33
    %v35 = vmul.f32 %v34, 0.33333334
    %v36 = vcvt.f32.s32.to.zero.pseudo %v35
    %v37 = vcvt.s32.f32 %v36
    %v38 = vmul.f32 %v37, 3.0
    %v39 = vsub.f32 %v34, %v38
    %vm40 = vcmp.eq.f32.partialorder %v39, 1.0
    %42 = vrot.lane.b32.xlu0 %v31, 105
    %v43 = vpop.permute.xlu0 %42
    %45 = vrot.lane.b32.xlu0 %v31, 1
    %v46 = vpop.permute.xlu0 %45
    %vm48 = vcmask 7168
    %v49 = vsel %vm48, %v43, %v46
    %v50 = vadd.f32 %v31, %v49
    %51 = vrot.lane.b32.xlu0 %v31, 127
    %v52 = vpop.permute.xlu0 %51
    %54 = vrot.lane.b32.xlu0 %v31, 23
    %v55 = vpop.permute.xlu0 %54
    %vm57 = vcmask 187392
    %v58 = vsel %vm57, %v52, %v55
    %v59 = vadd.f32 %v50, %v58
    %v60 = vsel %vm40, %v59, 0.0
    %v61 = vld [vmem:[%s2] sm:$0x1]
    %v62 = vrsqrt.pop %v60
    %v63 = vmul.f32 %v60, %v62
    %vm64 = vcmp.eq.f32.partialorder %v60, inf
    %v65 = vsel %vm64, %v60, %v63
    %vm66 = vcmp.eq.f32.partialorder %v60, 0.0
    %v67 = vand.u32 %v60, 2147483648
    %v68 = vsel %vm66, %v67, %v65
    %vm69 = vcmask 189440
    %v70 = vsel %vm69, %v68, 0.0
    %71 = vadd.xlane.f32.xlu0 %v70
    %v72 = vpop.xlane.xlu0 %71
    %v73 = vrot.slane %v72, 4
    %v74 = vadd.f32 %v72, %v73
    %v75 = vrot.slane %v74, 2
    %v76 = vadd.f32 %v74, %v75
    %v77 = vrot.slane %v76, 1
    %v78 = vadd.f32 %v76, %v77
    %s79 = vtos %v78
    %v80 = vstv %s79
    %v81 = vadd.f32 %v61, %v80
    %82 = vst [vmem:[%s2] sm:$0x1] %v81
    // Predicated region
    $region18: #{mpjpe_criterion.1} parent=1 // pred_check
      _
    $region19: #{mpjpe_criterion.1} parent=1 // pred_check_branch
      %84 = sbr.rel (0) target = $region21
    $region20: #{mpjpe_criterion.1} parent=1 // pred_region
      _
    $region21: #{mpjpe_criterion.1} parent=1 // pred_fallthru
      _
    // Predicated region
    $region22: #{mpjpe_criterion.1} parent=1 // pred_check
      _
    $region23: #{mpjpe_criterion.1} parent=1 // pred_check_branch
      %86 = sbr.rel (0) target = $region25
    $region24: #{mpjpe_criterion.1} parent=1 // pred_region
      _
    $region25: #{mpjpe_criterion.1} parent=1 // pred_fallthru
      _
    %87 = vsyncpa [#allocation3], 1

</llo_original>
